<compile_context>
chip_gen: v5e
topology: v5e:2x2
jax: 0.10.0
libtpu: 0.0.40
codegen_flags: <defaults>
</compile_context>

<pallas_src>
import functools

import jax
import jax.numpy as jnp
from jax.experimental import pallas as pl
from jax.experimental.pallas import tpu as pltpu

_LANES = 128
_SUBLANES = 8


def _round_up(v, m):
    return ((v + m - 1) // m) * m


def _tpu_vmem_capacity_bytes():
    """Per-core VMEM capacity (generation-aware); conservative fallback."""
    try:
        info = pltpu.get_tpu_info()
        for attr in ("vmem_capacity_bytes", "vmem_bytes"):
            val = getattr(info, attr, None)
            if val:
                return int(val)
    except Exception:
        pass
    return 64 * 1024 * 1024  # v7x-sized conservative default


def _vmem_estimate_bytes(tb, tk, h, cp, out_w, x_itemsize, x_bufs):
    x_blocks = x_bufs * tb * tk * x_itemsize          # pipelined activation tiles
    w1_blocks = 2 * tk * h * 2                        # bf16 w1 tile (double-buffer guard)
    other_w = 2 * (h * cp * 2 + h * 4 + out_w * 4)    # w2 bf16 + f32 biases (doubled)
    outs = 2 * tb * out_w * 4                         # double-buffered packed output
    acc = tb * h * 4                                  # f32 layer-1 accumulator scratch
    return x_blocks + w1_blocks + other_w + outs + acc


def _domain_classifier_kernel(x_ref, w1_ref, b1_ref, w2_ref, b2_ref, out_ref,
                              acc_ref, *, num_classes, cp, packed):
    k_idx = pl.program_id(1)

    @pl.when(k_idx == 0)
    def _():
        acc_ref[...] = jnp.zeros_like(acc_ref)

    # Layer-1 partial product for this K tile: bf16 MXU operands, f32 accumulation.
    x = x_ref[...].astype(jnp.bfloat16)   # no-op if activations arrive as bf16
    acc_ref[...] += jnp.dot(x, w1_ref[...], preferred_element_type=jnp.float32)

    @pl.when(k_idx == pl.num_programs(1) - 1)
    def _():
        h = acc_ref[...] + b1_ref[...]
        # Exact sigmoid: exp on the EUP + exact f32 divide (no approx-reciprocal
        # error feeding the second matmul; saturates cleanly to 0/1).
        h = 1.0 / (1.0 + jnp.exp(-h))
        logits = jnp.dot(h.astype(jnp.bfloat16), w2_ref[...],
                         preferred_element_type=jnp.float32) + b2_ref[...]
        col = jax.lax.broadcasted_iota(jnp.int32, logits.shape, dimension=1)
        if packed:
            # w2/b2 were pre-duplicated into lanes [C, 2C): compute the softmax on
            # that copy so one lane-dense slab carries logits [0,C) + softmax [C,2C).
            sm_lanes = (col >= num_classes) & (col < 2 * num_classes)
        else:
            sm_lanes = col < num_classes
        masked = jnp.where(sm_lanes, logits, -jnp.inf)
        m = jnp.max(masked, axis=-1, keepdims=True)
        e = jnp.exp(masked - m)
        denom = jnp.sum(e, axis=-1, keepdims=True)
        sm = e * pl.reciprocal(denom, approx=True)   # approx recip only for softmax
        if packed:
            out_ref[...] = jnp.where(col < num_classes, logits, sm)
        else:
            out_ref[:, :cp] = logits
            out_ref[:, cp:] = sm


def prepare_domain_classifier_params(params):
    """One-time weight cast/pad for the kernel (call once, reuse every forward).

    w1 -> bf16 [K, H]; w2/b2 -> lane-padded to a 128 multiple and, when
    2*num_classes <= 128, duplicated into lanes [C, 2C) so the kernel can emit
    logits + softmax in a single lane-dense output slab.
    """
    w1, b1, w2, b2 = params
    h = w1.shape[1]
    c = w2.shape[1]
    cp = _round_up(c, _LANES)
    packed = 2 * c <= cp
    w2_bf = w2.astype(jnp.bfloat16)
    b2f = b2.reshape(1, c).astype(jnp.float32)
    w2p = jnp.zeros((h, cp), jnp.bfloat16).at[:, :c].set(w2_bf)
    b2p = jnp.zeros((1, cp), jnp.float32).at[:, :c].set(b2f)
    if packed:
        w2p = w2p.at[:, c:2 * c].set(w2_bf)
        b2p = b2p.at[:, c:2 * c].set(b2f)
    return {
        "w1": w1.astype(jnp.bfloat16),
        "b1": b1.reshape(1, h).astype(jnp.float32),
        "w2": w2p,
        "b2": b2p,
        "num_classes": c,
        "cp": cp,
        "packed": packed,
    }


def domain_classifier_forward(x, constant, prepared, reverse_grad=True,
                              max_k_block=None):
    """Forward pass of Domain_classifier. Returns (softmax_probs, logits)."""
    # TODO(synk): GradReverse only alters the backward pass (grad * -constant); the
    # forward is the identity, so constant/reverse_grad are unused here.  For DANN
    # training this kernel must be wrapped in jax.custom_vjp to reverse gradients.
    del constant, reverse_grad
    w1, b1, w2, b2 = prepared["w1"], prepared["b1"], prepared["w2"], prepared["b2"]
    C, CP, packed = prepared["num_classes"], prepared["cp"], prepared["packed"]

    B = x.shape[0]
    x2d = x.reshape(B, -1)             # metadata-only flatten, keep caller dtype
    K = x2d.shape[1]
    H = w1.shape[1]
    OUT_W = CP if packed else 2 * CP
    x_item = x2d.dtype.itemsize

    vmem_cap = _tpu_vmem_capacity_bytes()
    budget = max(16 * 1024 * 1024, int(vmem_cap * 0.45))

    # K tile: stream w1 over a reduction grid axis when it would not comfortably
    # fit resident (double-buffer guarded); otherwise keep the full K in one block.
    TK = K
    if K % _LANES == 0 and 2 * K * H * 2 > budget // 2:
        TK = _LANES
        for cand in (4096, 2048, 1024, 512, 256, 128):
            if K % cand == 0 and 2 * cand * H * 2 <= budget // 4:
                TK = cand
                break
    if max_k_block is not None and K % max_k_block == 0 and max_k_block < TK:
        TK = max_k_block

    def fits(tb, bufs=2):
        return _vmem_estimate_bytes(tb, TK, H, CP, OUT_W, x_item, bufs) <= budget

    # Batch tile: largest that fits the per-generation budget, >= 2 grid steps when
    # B >= 16 (lets the "parallel" axis shard across v7x's 2 TensorCores), and
    # preferably dividing B exactly (no batch padding, no pad-row slice copies).
    if B <= _SUBLANES:
        TB = B
    else:
        cap = min(B, 1024)
        if B >= 2 * _SUBLANES:
            cap = min(cap, _round_up((B + 1) // 2, _SUBLANES))
        TB = max(_SUBLANES, (cap // _SUBLANES) * _SUBLANES)
        while TB > _SUBLANES and not fits(TB):
            TB = max(_SUBLANES, ((TB // 2) // _SUBLANES) * _SUBLANES)
        for cand in range(TB, max(_SUBLANES - 1, TB // 2 - 1), -_SUBLANES):
            if B % cand == 0:
                TB = cand
                break

    B_pad = _round_up(B, TB)
    if B_pad != B:
        x2d = jnp.pad(x2d, ((0, B_pad - B), (0, 0)))
    nb, nk = B_pad // TB, K // TK

    # Deeper activation pipelining when there is a pipeline to fill and VMEM headroom.
    x_bufs = 3 if (nb * nk >= 3 and fits(TB, 3)) else 2
    x_map = lambda i, k: (i, k)
    x_spec = pl.BlockSpec((TB, TK), x_map)
    if x_bufs == 3:
        try:
            x_spec = pl.BlockSpec((TB, TK), x_map, pipeline_mode=pl.Buffered(3))
        except Exception:          # pipeline_mode unsupported -> default 2 buffers
            x_bufs = 2

    est = _vmem_estimate_bytes(TB, TK, H, CP, OUT_W, x_item, x_bufs)
    vmem_limit = int(min(int(vmem_cap * 0.75), max(2 * est, 32 * 1024 * 1024)))

    flops = 2 * B_pad * K * H + 2 * B_pad * H * CP
    transcendentals = B_pad * (H + CP)
    bytes_accessed = (B_pad * K * x_item + K * H * 2 + H * CP * 2
                      + (H + CP) * 4 + B_pad * OUT_W * 4)

    kernel = functools.partial(_domain_classifier_kernel,
                               num_classes=C, cp=CP, packed=packed)
    out = pl.pallas_call(
        kernel,
        out_shape=jax.ShapeDtypeStruct((B_pad, OUT_W), jnp.float32),
        grid=(nb, nk),
        in_specs=[
            x_spec,                                       # activations, (batch, K) tiled
            pl.BlockSpec((TK, H), lambda i, k: (k, 0)),   # w1 streamed over K
            pl.BlockSpec((1, H), lambda i, k: (0, 0)),    # b1 resident
            pl.BlockSpec((H, CP), lambda i, k: (0, 0)),   # w2 (lane-padded) resident
            pl.BlockSpec((1, CP), lambda i, k: (0, 0)),   # b2 (lane-padded) resident
        ],
        out_specs=pl.BlockSpec((TB, OUT_W), lambda i, k: (i, 0)),
        scratch_shapes=[pltpu.VMEM((TB, H), jnp.float32)],
        compiler_params=pltpu.CompilerParams(
            dimension_semantics=("parallel", "arbitrary"),
            vmem_limit_bytes=vmem_limit),
        cost_estimate=pl.CostEstimate(flops=flops,
                                      transcendentals=transcendentals,
                                      bytes_accessed=bytes_accessed),
    )(x2d, w1, b1, w2, b2)

    logits = out[:B, :C]
    softmax = out[:B, C:2 * C] if packed else out[:B, CP:CP + C]
    return softmax, logits


def init_domain_classifier_params(key, fc_input_dim, hidden_dim, num_classes):
    """kaiming_normal_ (fan_in, gain=sqrt(2)) weights, zero bias — as _init_weights.
    Weights stored [in, out] (transpose of torch layout) so the kernel does x @ W."""
    k1, k2 = jax.random.split(key)
    w1 = jax.random.normal(k1, (fc_input_dim, hidden_dim), jnp.float32) * jnp.sqrt(
        2.0 / fc_input_dim)
    b1 = jnp.zeros((hidden_dim,), jnp.float32)
    w2 = jax.random.normal(k2, (hidden_dim, num_classes), jnp.float32) * jnp.sqrt(
        2.0 / hidden_dim)
    b2 = jnp.zeros((num_classes,), jnp.float32)
    return w1, b1, w2, b2


def reference_forward(x, params):
    w1, b1, w2, b2 = params
    B = x.shape[0]
    xf = x.reshape(B, -1).astype(jnp.float32)
    h = jax.nn.sigmoid(xf @ w1 + b1)
    logits = h @ w2 + b2
    return jax.nn.softmax(logits, axis=1), logits


if __name__ == "__main__":
    key = jax.random.PRNGKey(0)
    kx1, kw1, kx2, kw2 = jax.random.split(key, 4)
    hidden_dim, num_classes = 32, 2

    # Test 1: small module-consistent shapes (batch=2, input_dim=4, seq_length=8).
    B, C_in, L = 2, 4, 8
    fc_input_dim = C_in * L
    x = jax.random.normal(kx1, (B, C_in, L), jnp.float32)
    raw = init_domain_classifier_params(kw1, fc_input_dim, hidden_dim, num_classes)
    prepared = prepare_domain_classifier_params(raw)
    sm_out, logit_out = domain_classifier_forward(x, constant=1.0, prepared=prepared)
    sm_out, logit_out = jax.block_until_ready((sm_out, logit_out))
    ref_sm, ref_logits = reference_forward(x, raw)
    assert sm_out.shape == (B, num_classes) and logit_out.shape == (B, num_classes)
    # bf16 MXU operands with f32 accumulation -> loosened tolerance vs. pure f32 ref.
    assert jnp.allclose(logit_out, ref_logits, atol=5e-2, rtol=5e-2), (
        logit_out, ref_logits)
    assert jnp.allclose(sm_out, ref_sm, atol=5e-2, rtol=5e-2), (sm_out, ref_sm)

    # Test 2: exercises the K-reduction grid axis, multi-step parallel batch grid
    # and deeper activation buffering (batch=16, input_dim=4, seq_length=64).
    B2, C_in2, L2 = 16, 4, 64
    fc2 = C_in2 * L2
    x2 = jax.random.normal(kx2, (B2, C_in2, L2), jnp.float32)
    raw2 = init_domain_classifier_params(kw2, fc2, hidden_dim, num_classes)
    prepared2 = prepare_domain_classifier_params(raw2)
    sm2, logit2 = domain_classifier_forward(x2, constant=1.0, prepared=prepared2,
                                            max_k_block=128)
    sm2, logit2 = jax.block_until_ready((sm2, logit2))
    ref_sm2, ref_logits2 = reference_forward(x2, raw2)
    assert sm2.shape == (B2, num_classes) and logit2.shape == (B2, num_classes)
    assert jnp.allclose(logit2, ref_logits2, atol=5e-2, rtol=5e-2), (
        logit2, ref_logits2)
    assert jnp.allclose(sm2, ref_sm2, atol=5e-2, rtol=5e-2), (sm2, ref_sm2)

    print("KERNEL_OK")
</pallas_src>

<mosaic_0001>
module attributes {stable_mosaic.version = 11 : i64} {
  func.func @_domain_classifier_kernel(%arg0: i32, %arg1: i32, %arg2: memref<2x32xf32, #tpu.memory_space<vmem>>, %arg3: memref<32x32xbf16, #tpu.memory_space<vmem>>, %arg4: memref<1x32xf32, #tpu.memory_space<vmem>>, %arg5: memref<32x128xbf16, #tpu.memory_space<vmem>>, %arg6: memref<1x128xf32, #tpu.memory_space<vmem>>, %arg7: memref<2x128xf32, #tpu.memory_space<vmem>>, %arg8: memref<2x32xf32, #tpu.memory_space<vmem>>) attributes {dimension_semantics = [#tpu.dimension_semantics<parallel>, #tpu.dimension_semantics<arbitrary>], iteration_bounds = array<i64: 1, 1>, scalar_prefetch = 0 : i64, scratch_operands = 1 : i64, tpu.core_type = #tpu.core_type<tc>, window_params = [{transform_indices = @transform_0, window_bounds = array<i64: 2, 32>}, {transform_indices = @transform_1, window_bounds = array<i64: 32, 32>}, {pipeline_mode = #tpu.pipeline_mode<synchronous>, transform_indices = @transform_2, window_bounds = array<i64: 1, 32>}, {pipeline_mode = #tpu.pipeline_mode<synchronous>, transform_indices = @transform_3, window_bounds = array<i64: 32, 128>}, {pipeline_mode = #tpu.pipeline_mode<synchronous>, transform_indices = @transform_4, window_bounds = array<i64: 1, 128>}, {transform_indices = @transform_5, window_bounds = array<i64: 2, 128>}]} {
    %c0_i32 = arith.constant 0 : i32
    %0 = arith.cmpi eq, %arg1, %c0_i32 : i32
    %1 = arith.extui %0 : i1 to i32
    %c0_i32_0 = arith.constant 0 : i32
    %2 = arith.cmpi ne, %1, %c0_i32_0 : i32
    scf.if %2 {
      %cst_10 = arith.constant 0.000000e+00 : f32
      %13 = vector.broadcast %cst_10 : f32 to vector<2x32xf32>
      %c0_11 = arith.constant 0 : index
      %c0_12 = arith.constant 0 : index
      %14 = vector.load %arg8[%c0_11, %c0_12] : memref<2x32xf32, #tpu.memory_space<vmem>>, vector<2x32xf32>
      tpu.vector_store %arg8[%c0_11, %c0_12], %13 {strides = array<i32>} : memref<2x32xf32, #tpu.memory_space<vmem>>, vector<2x32xf32>,
    } else {
    }
    %c0 = arith.constant 0 : index
    %c0_1 = arith.constant 0 : index
    %3 = vector.load %arg2[%c0, %c0_1] : memref<2x32xf32, #tpu.memory_space<vmem>>, vector<2x32xf32>
    %4 = arith.truncf %3 : vector<2x32xf32> to vector<2x32xbf16>
    %c0_2 = arith.constant 0 : index
    %c0_3 = arith.constant 0 : index
    %5 = vector.load %arg8[%c0_2, %c0_3] : memref<2x32xf32, #tpu.memory_space<vmem>>, vector<2x32xf32>
    %c0_4 = arith.constant 0 : index
    %c0_5 = arith.constant 0 : index
    %6 = vector.load %arg3[%c0_4, %c0_5] : memref<32x32xbf16, #tpu.memory_space<vmem>>, vector<32x32xbf16>
    %cst = arith.constant dense<0.000000e+00> : vector<2x32xf32>
    %7 = tpu.matmul %4, %6, %cst {dimension_numbers = #tpu.dot_dimension_numbers<[1], [0], [0], [1], [0, 0, 1, 1], [], []>} : vector<2x32xbf16>, vector<32x32xbf16>, vector<2x32xf32> -> vector<2x32xf32>
    %8 = arith.addf %5, %7 : vector<2x32xf32>
    %c0_6 = arith.constant 0 : index
    %c0_7 = arith.constant 0 : index
    %9 = vector.load %arg8[%c0_6, %c0_7] : memref<2x32xf32, #tpu.memory_space<vmem>>, vector<2x32xf32>
    tpu.vector_store %arg8[%c0_6, %c0_7], %8 {strides = array<i32>} : memref<2x32xf32, #tpu.memory_space<vmem>>, vector<2x32xf32>,
    %c0_i32_8 = arith.constant 0 : i32
    %10 = arith.cmpi eq, %arg1, %c0_i32_8 : i32
    %11 = arith.extui %10 : i1 to i32
    %c0_i32_9 = arith.constant 0 : i32
    %12 = arith.cmpi ne, %11, %c0_i32_9 : i32
    scf.if %12 {
      %c0_10 = arith.constant 0 : index
      %c0_11 = arith.constant 0 : index
      %13 = vector.load %arg8[%c0_10, %c0_11] : memref<2x32xf32, #tpu.memory_space<vmem>>, vector<2x32xf32>
      %c0_12 = arith.constant 0 : index
      %c0_13 = arith.constant 0 : index
      %14 = vector.load %arg4[%c0_12, %c0_13] : memref<1x32xf32, #tpu.memory_space<vmem>>, vector<1x32xf32>
      %15 = vector.broadcast %14 : vector<1x32xf32> to vector<2x32xf32>
      %16 = arith.addf %13, %15 : vector<2x32xf32>
      %cst_14 = arith.constant 0.000000e+00 : f32
      %17 = vector.broadcast %cst_14 : f32 to vector<2x32xf32>
      %18 = arith.subf %17, %16 : vector<2x32xf32>
      %19 = math.exp %18 : vector<2x32xf32>
      %cst_15 = arith.constant 1.000000e+00 : f32
      %20 = vector.broadcast %cst_15 : f32 to vector<2x32xf32>
      %21 = arith.addf %20, %19 : vector<2x32xf32>
      %cst_16 = arith.constant 1.000000e+00 : f32
      %22 = vector.broadcast %cst_16 : f32 to vector<2x32xf32>
      %23 = arith.divf %22, %21 : vector<2x32xf32>
      %24 = arith.truncf %23 : vector<2x32xf32> to vector<2x32xbf16>
      %c0_17 = arith.constant 0 : index
      %c0_18 = arith.constant 0 : index
      %25 = vector.load %arg5[%c0_17, %c0_18] : memref<32x128xbf16, #tpu.memory_space<vmem>>, vector<32x128xbf16>
      %cst_19 = arith.constant dense<0.000000e+00> : vector<2x128xf32>
      %26 = tpu.matmul %24, %25, %cst_19 {dimension_numbers = #tpu.dot_dimension_numbers<[1], [0], [0], [1], [0, 0, 1, 1], [], []>} : vector<2x32xbf16>, vector<32x128xbf16>, vector<2x128xf32> -> vector<2x128xf32>
      %c0_20 = arith.constant 0 : index
      %c0_21 = arith.constant 0 : index
      %27 = vector.load %arg6[%c0_20, %c0_21] : memref<1x128xf32, #tpu.memory_space<vmem>>, vector<1x128xf32>
      %28 = vector.broadcast %27 : vector<1x128xf32> to vector<2x128xf32>
      %29 = arith.addf %26, %28 : vector<2x128xf32>
      %30 = tpu.iota {dimensions = array<i32: 1>} : vector<2x128xi32>
      %c2_i32 = arith.constant 2 : i32
      %31 = vector.broadcast %c2_i32 : i32 to vector<2x128xi32>
      %32 = arith.cmpi sge, %30, %31 : vector<2x128xi32>
      %c4_i32 = arith.constant 4 : i32
      %33 = vector.broadcast %c4_i32 : i32 to vector<2x128xi32>
      %34 = arith.cmpi slt, %30, %33 : vector<2x128xi32>
      %35 = arith.andi %32, %34 : vector<2x128xi1>
      %cst_22 = arith.constant 0xFF800000 : f32
      %36 = vector.broadcast %cst_22 : f32 to vector<2x128xf32>
      %37 = arith.select %35, %29, %36 : vector<2x128xi1>, vector<2x128xf32>
      %cst_23 = arith.constant dense<0xFF800000> : vector<2xf32>
      %38 = vector.multi_reduction <maximumf>, %37, %cst_23 [1] : vector<2x128xf32> to vector<2xf32>
      %39 = vector.shape_cast %38 : vector<2xf32> to vector<2x1xf32>
      %40 = vector.broadcast %39 : vector<2x1xf32> to vector<2x128xf32>
      %41 = arith.subf %37, %40 : vector<2x128xf32>
      %42 = math.exp %41 : vector<2x128xf32>
      %cst_24 = arith.constant dense<0.000000e+00> : vector<2xf32>
      %43 = vector.multi_reduction <add>, %42, %cst_24 [1] : vector<2x128xf32> to vector<2xf32>
      %44 = vector.shape_cast %43 : vector<2xf32> to vector<2x1xf32>
      %45 = tpu.reciprocal %44 {approx = true} : vector<2x1xf32> -> vector<2x1xf32>
      %46 = vector.broadcast %45 : vector<2x1xf32> to vector<2x128xf32>
      %47 = arith.mulf %42, %46 : vector<2x128xf32>
      %c2_i32_25 = arith.constant 2 : i32
      %48 = vector.broadcast %c2_i32_25 : i32 to vector<2x128xi32>
      %49 = arith.cmpi slt, %30, %48 : vector<2x128xi32>
      %50 = arith.select %49, %29, %47 : vector<2x128xi1>, vector<2x128xf32>
      %c0_26 = arith.constant 0 : index
      %c0_27 = arith.constant 0 : index
      %51 = vector.load %arg7[%c0_26, %c0_27] : memref<2x128xf32, #tpu.memory_space<vmem>>, vector<2x128xf32>
      tpu.vector_store %arg7[%c0_26, %c0_27], %50 {strides = array<i32>} : memref<2x128xf32, #tpu.memory_space<vmem>>, vector<2x128xf32>,
    } else {
    }
    return
  }
  func.func @transform_0(%arg0: i32, %arg1: i32) -> (i32, i32) {
    %c0_i32 = arith.constant 0 : i32
    return %arg0, %arg1 : i32, i32
  }
  func.func @transform_1(%arg0: i32, %arg1: i32) -> (i32, i32) {
    %c0_i32 = arith.constant 0 : i32
    %c0_i32_0 = arith.constant 0 : i32
    return %arg1, %c0_i32 : i32, i32
  }
  func.func @transform_2(%arg0: i32, %arg1: i32) -> (i32, i32) {
    %c0_i32 = arith.constant 0 : i32
    %c0_i32_0 = arith.constant 0 : i32
    %c0_i32_1 = arith.constant 0 : i32
    return %c0_i32, %c0_i32_0 : i32, i32
  }
  func.func @transform_3(%arg0: i32, %arg1: i32) -> (i32, i32) {
    %c0_i32 = arith.constant 0 : i32
    %c0_i32_0 = arith.constant 0 : i32
    %c0_i32_1 = arith.constant 0 : i32
    return %c0_i32, %c0_i32_0 : i32, i32
  }
  func.func @transform_4(%arg0: i32, %arg1: i32) -> (i32, i32) {
    %c0_i32 = arith.constant 0 : i32
    %c0_i32_0 = arith.constant 0 : i32
    %c0_i32_1 = arith.constant 0 : i32
    return %c0_i32, %c0_i32_0 : i32, i32
  }
  func.func @transform_5(%arg0: i32, %arg1: i32) -> (i32, i32) {
    %c0_i32 = arith.constant 0 : i32
    %c0_i32_0 = arith.constant 0 : i32
    return %arg0, %c0_i32 : i32, i32
  }
}

</mosaic_0001>

<llo_original>
// kernel: tpu_custom_call.1
$region0: #{tpu_custom_call.1}
  #allocation0 [shape = 'u32[]', space=smem, size = 0x4, offset = 0x4, fixed_abs, tag = 'smem constant byte address 0x4 - core index']
  #allocation1 [shape = 'u32[72,128]{1,0:T(1,128)}', space=vmem, size = 0x9000, scoped, tag = 'internal scratch']
  #allocation2 [shape = 'f32[2,32]{1,0:T(2,128)}', space=vmem, size = 0x400, scoped, tag = 'scratch operand']
  %s0 = inlined_call_operand.hbm [shape: f32[2,32], index: 0, kind: input, shape index: {}]
  %s1 = inlined_call_operand.hbm [shape: bf16[32,32], index: 1, kind: input, shape index: {}]
  %s2 = inlined_call_operand.vmem [shape: f32[1,32], index: 2, kind: input, shape index: {}]
  %s3 = inlined_call_operand.hbm [shape: bf16[32,128], index: 3, kind: input, shape index: {}]
  %s4 = inlined_call_operand.vmem [shape: f32[1,128], index: 4, kind: input, shape index: {}]
  %s5 = inlined_call_operand.hbm [shape: f32[2,128], index: 5, kind: output, shape index: {}]
  %s6 = sld [smem:[#allocation0]]
  $region50: #{tpu_custom_call.1} parent=0
    _
  %s8 = ssub.s32 1, %s6
  %s9 = scalar_select 0, %s8, %s6
  $region1: #{tpu_custom_call.1} parent=0
    #allocation3 [shape = 'u8[1024]{0}', space=vmem, size = 0x400, scoped, tag = 'input window, operand 0, single buffered']
    #allocation4 [shape = 's32[1]{0}', space=sflag, size = 0x4, scoped, tag = 'scoped memory for tpu_custom_call.1']
    #allocation5 [shape = 's32[1]{0}', space=sflag, size = 0x4, scoped, tag = 'scoped memory for tpu_custom_call.1']
    #allocation6 [shape = 'u8[8192]{0}', space=vmem, size = 0x2000, scoped, tag = 'input window, operand 1, single buffered']
    #allocation7 [shape = 's32[1]{0}', space=sflag, size = 0x4, scoped, tag = 'scoped memory for tpu_custom_call.1']
    #allocation8 [shape = 'u8[8192]{0}', space=vmem, size = 0x2000, scoped, tag = 'input window, operand 3, single buffered']
    #allocation9 [shape = 'u8[1024]{0}', space=vmem, size = 0x400, scoped, tag = 'output window, operand 0, single buffered']
    %10 = vsyncpa [#allocation4], 0
    %11 = vsyncpa [#allocation7], 0
    %12 = vsyncpa [#allocation5], 0
    // Predicated region
    $region2: #{tpu_custom_call.1} parent=1 // pred_check
      _
    $region3: #{tpu_custom_call.1} parent=1 // pred_check_branch
      %14 = sbr.rel (0) target = $region5
    $region4: #{tpu_custom_call.1} parent=1 // pred_region
      %16 = vsyncadd [#allocation4], 0
      %s18 = sshll.u32 %s0, 4
      %s19 = int_to_ptr.hbm [resolvable:$true] %s18
      %s20 = sshll.u32 [#allocation3], 4
      %s21 = int_to_ptr.vmem [resolvable:$true] %s20
      %23 = dma.hbm_to_vmem [thread:$0]  %s19, 32, %s21, [#allocation4]
    $region5: #{tpu_custom_call.1} parent=1 // pred_fallthru
      _
    // Predicated region
    $region6: #{tpu_custom_call.1} parent=1 // pred_check
      _
    $region7: #{tpu_custom_call.1} parent=1 // pred_check_branch
      %25 = sbr.rel (0) target = $region9
    $region8: #{tpu_custom_call.1} parent=1 // pred_region
      %27 = vsyncadd [#allocation7], 0
      %s28 = sshll.u32 %s1, 4
      %s29 = int_to_ptr.hbm [resolvable:$true] %s28
      %s30 = sshll.u32 [#allocation6], 4
      %s31 = int_to_ptr.vmem [resolvable:$true] %s30
      %36 = dma.hbm_to_vmem [thread:$0]  %s29, 256, %s31, [#allocation7], 64, 64, 4
    $region9: #{tpu_custom_call.1} parent=1 // pred_fallthru
      _
    // Predicated region
    $region10: #{tpu_custom_call.1} parent=1 // pred_check
      _
    $region11: #{tpu_custom_call.1} parent=1 // pred_check_branch
      %38 = sbr.rel (0) target = $region13
    $region12: #{tpu_custom_call.1} parent=1 // pred_region
      _
    $region13: #{tpu_custom_call.1} parent=1 // pred_fallthru
      _
    // Predicated region
    $region14: #{tpu_custom_call.1} parent=1 // pred_check
      _
    $region15: #{tpu_custom_call.1} parent=1 // pred_check_branch
      %40 = sbr.rel (0) target = $region17
    $region16: #{tpu_custom_call.1} parent=1 // pred_region
      %42 = vsyncadd [#allocation7], 0
      %s43 = sshll.u32 %s3, 4
      %s44 = int_to_ptr.hbm [resolvable:$true] %s43
      %s45 = sshll.u32 [#allocation8], 4
      %s46 = int_to_ptr.vmem [resolvable:$true] %s45
      %51 = dma.hbm_to_vmem [thread:$0]  %s44, 256, %s46, [#allocation7], 64, 64, 4
    $region17: #{tpu_custom_call.1} parent=1 // pred_fallthru
      _
    // Predicated region
    $region18: #{tpu_custom_call.1} parent=1 // pred_check
      _
    $region19: #{tpu_custom_call.1} parent=1 // pred_check_branch
      %53 = sbr.rel (0) target = $region21
    $region20: #{tpu_custom_call.1} parent=1 // pred_region
      _
    $region21: #{tpu_custom_call.1} parent=1 // pred_fallthru
      _
    // Predicated region
    $region22: #{tpu_custom_call.1} parent=1 // pred_check
      _
    $region23: #{tpu_custom_call.1} parent=1 // pred_check_branch
      %55 = sbr.rel (0) target = $region25
    $region24: #{tpu_custom_call.1} parent=1 // pred_region
      %57 = dma.done [#allocation4], 32
    $region25: #{tpu_custom_call.1} parent=1 // pred_fallthru
      _
    // Predicated region
    $region26: #{tpu_custom_call.1} parent=1 // pred_check
      _
    $region27: #{tpu_custom_call.1} parent=1 // pred_check_branch
      %59 = sbr.rel (0) target = $region29
    $region28: #{tpu_custom_call.1} parent=1 // pred_region
      %61 = dma.done [#allocation7], 256
    $region29: #{tpu_custom_call.1} parent=1 // pred_fallthru
      _
    // Predicated region
    $region30: #{tpu_custom_call.1} parent=1 // pred_check
      _
    $region31: #{tpu_custom_call.1} parent=1 // pred_check_branch
      %63 = sbr.rel (0) target = $region33
    $region32: #{tpu_custom_call.1} parent=1 // pred_region
      %65 = dma.done [#allocation7], 256
    $region33: #{tpu_custom_call.1} parent=1 // pred_fallthru
      _
    %p67 = scmp.eq.s32.totalorder 0, 0
    // Predicated region
    $region34: #{tpu_custom_call.1} parent=1 // pred_check
      %p68 = pneg %p67
    $region35: #{tpu_custom_call.1} parent=1 // pred_check_branch
      %70 = sbr.rel (%p68) target = $region37
    $region36: #{tpu_custom_call.1} parent=1 // pred_region
      %vm71 = vcmask 254976
      %72 = vst.msk [vmem:[#allocation2] sm:$0x3] %vm71, 0.0
    $region37: #{tpu_custom_call.1} parent=1 // pred_fallthru
      _
    %v73 = vld [vmem:[#allocation3] sm:$0x3]
    %v74 = vpack.c.bf16 %v73, %v73
    %v75 = vld [vmem:[#allocation2] sm:$0x3]
    %v76 = vld [vmem:[#allocation6] sm:$0xf]
    %v77 = vld [vmem:[#allocation6 + $0x4] sm:$0xf]
    %v78 = vld [vmem:[#allocation6 + $0x8] sm:$0xf]
    %v79 = vld [vmem:[#allocation6 + $0xc] sm:$0xf]
    %v84 = vunpack.c.l.b16 %v76
    %v85 = vunpack.c.l.b16 %v77
    %v86 = vunpack.c.l.b16 %v78
    %v87 = vunpack.c.l.b16 %v79
    %v88 = vpack.c.b16 %v85, %v84
    %v89 = vpack.c.b16 %v87, %v86
    %vm92 = vcmask 261120
    %v94 = vsel %vm92, %v74, 0
    %96 = vmatpush.bf16.msra.mxu0 0
    %97 = vmatpush.bf16.msra.mxu0 0
    %98 = vmatpush.bf16.msra.mxu0 0
    %99 = vmatpush.bf16.msra.mxu0 0
    %100 = vmatpush.bf16.msra.mxu0 0
    %101 = vmatpush.bf16.msra.mxu0 0
    %102 = vmatpush.bf16.msra.mxu0 %v89
    %103 = vmatpush.bf16.msra.mxu0 %v88
    %104 = vmatmul.bf16.gmra.mxu0 %v94
    %v105 = vpop.f32.mrf.mxu0
    %v106 = vadd.f32 0.0, %v105
    %v107 = vpop.f32.mrf.mxu0
    %108 = vdwg.mxu0
    %v109 = vadd.f32 %v75, %v106
    %vm110 = vcmask 254976
    %111 = vst.msk [vmem:[#allocation2] sm:$0x3] %vm110, %v109
    // Predicated region
    $region38: #{tpu_custom_call.1} parent=1 // pred_check
      %p112 = pneg %p67
    $region39: #{tpu_custom_call.1} parent=1 // pred_check_branch
      %114 = sbr.rel (%p112) target = $region41
    $region40: #{tpu_custom_call.1} parent=1 // pred_region
      %v115 = vld [vmem:[#allocation2] sm:$0x3]
      %v116 = vld [vmem:[%s2] sm:$0x1]
      %v118 = vperm.slane %v116, 0
      %v120 = vadd.f32 %v115, %v118
      %v121 = vsub.f32 0.0, %v120
      %v122 = vmul.f32 %v121, 1.442695
      %v123 = vpow.pop %v122
      %v124 = vadd.f32 %v123, 1.0
      %v125 = vrcp.pop %v124
      %v126 = vmul.f32 %v124, %v125
      %v127 = vsub.f32 1.0, %v126
      %v128 = vmul.f32 %v125, %v127
      %v129 = vadd.f32 %v125, %v128
      %vm130 = vweird.f32 %v124
      %vm131 = vweird.f32 %v125
      %vm132 = vmor %vm130, %vm131
      %v133 = vsel %vm132, %v125, %v129
      %v134 = vand.u32 2147483647, %v124
      %vm135 = vcmp.eq.f32.partialorder %v134, 8.507059e+37
      %v136 = vand.u32 %v124, 2147483648
      %v137 = vor.u32 1.1754944e-38, %v136
      %v138 = vsel %vm135, %v137, %v133
      %v139 = vmul.f32 1.0, %v138
      %v140 = vpack.c.bf16 %v139, %v139
      %v141 = vld [vmem:[#allocation8] sm:$0xf]
      %v142 = vld [vmem:[#allocation8 + $0x4] sm:$0xf]
      %v143 = vld [vmem:[#allocation8 + $0x8] sm:$0xf]
      %v144 = vld [vmem:[#allocation8 + $0xc] sm:$0xf]
      %v145 = vld [vmem:[%s4] sm:$0x1]
      %v147 = vperm.slane %v145, 0
      %v153 = vunpack.c.l.b16 %v141
      %v154 = vunpack.c.l.b16 %v142
      %v155 = vunpack.c.l.b16 %v143
      %v156 = vunpack.c.l.b16 %v144
      %v157 = vpack.c.b16 %v154, %v153
      %v158 = vpack.c.b16 %v156, %v155
      %v162 = vsel %vm92, %v140, 0
      %164 = vmatpush.bf16.msra.mxu0 0
      %165 = vmatpush.bf16.msra.mxu0 0
      %166 = vmatpush.bf16.msra.mxu0 0
      %167 = vmatpush.bf16.msra.mxu0 0
      %168 = vmatpush.bf16.msra.mxu0 0
      %169 = vmatpush.bf16.msra.mxu0 0
      %170 = vmatpush.bf16.msra.mxu0 %v158
      %171 = vmatpush.bf16.msra.mxu0 %v157
      %172 = vmatmul.bf16.gmra.mxu0 %v162
      %v173 = vpop.f32.mrf.mxu0
      %v174 = vadd.f32 %v147, %v173
      %v175 = vpop.f32.mrf.mxu0
      %176 = vdwg.mxu0
      %v177 = vlaneseq
      %v178 = vand.u32 %v177, 127
      %vm179 = vcmp.ge.s32.totalorder %v178, 2
      %vm180 = vcmp.lt.s32.totalorder %v178, 4
      %vm181 = vmand %vm179, %vm180
      %v182 = vsel %vm181, %v174, -inf
      %vm183 = vcmask 1041408
      %v184 = vsel %vm183, %v182, -inf
      %185 = vmax.xlane.f32.xlu0 %v184
      %v186 = vpop.xlane.xlu0 %185
      %v187 = vsub.f32 %v182, %v186
      %v188 = vmul.f32 %v187, 1.442695
      %v189 = vpow.pop %v188
      %v190 = vsel %vm183, %v189, 0.0
      %191 = vadd.xlane.f32.xlu0 %v190
      %v192 = vpop.xlane.xlu0 %191
      %v193 = vrcp.pop %v192
      %v194 = vmul.f32 %v189, %v193
      %vm195 = vcmp.lt.s32.totalorder %v178, 2
      %v196 = vsel %vm195, %v174, %v194
      %197 = vst [vmem:[#allocation9] sm:$0x3] %v196
    $region41: #{tpu_custom_call.1} parent=1 // pred_fallthru
      _
    // Predicated region
    $region42: #{tpu_custom_call.1} parent=1 // pred_check
      _
    $region43: #{tpu_custom_call.1} parent=1 // pred_check_branch
      %199 = sbr.rel (0) target = $region45
    $region44: #{tpu_custom_call.1} parent=1 // pred_region
      %201 = vsyncadd [#allocation5], 0
      %s203 = sshll.u32 [#allocation9], 4
      %s204 = int_to_ptr.vmem [resolvable:$true] %s203
      %s205 = sshll.u32 %s5, 4
      %s206 = int_to_ptr.hbm [resolvable:$true] %s205
      %208 = dma.vmem_to_hbm [thread:$0]  %s204, 32, %s206, [#allocation5]
    $region45: #{tpu_custom_call.1} parent=1 // pred_fallthru
      _
    // Predicated region
    $region46: #{tpu_custom_call.1} parent=1 // pred_check
      _
    $region47: #{tpu_custom_call.1} parent=1 // pred_check_branch
      %210 = sbr.rel (0) target = $region49
    $region48: #{tpu_custom_call.1} parent=1 // pred_region
      %212 = dma.done [#allocation5], 32
    $region49: #{tpu_custom_call.1} parent=1 // pred_fallthru
      _
    %213 = vsyncpa [#allocation4], 1
    %214 = vsyncpa [#allocation7], 1
    %215 = vsyncpa [#allocation5], 1

</llo_original>
